<compile_context>
chip_gen: v6e
topology: v6e:2x2x1
jax: 0.10.0
libtpu: 0.0.40
codegen_flags: <defaults>
</compile_context>

<pallas_src>
import functools

import jax
import jax.numpy as jnp
from jax.experimental import pallas as pl
from jax.experimental.pallas import tpu as pltpu

LEAKY_SLOPE = 0.2
BN_EPS = 1e-5


def _round_up(n, m):
    return ((n + m - 1) // m) * m


def _cdiv(n, m):
    return (n + m - 1) // m


def _leaky_relu(h):
    return jnp.where(h > 0, h, LEAKY_SLOPE * h)


# ---------------------------------------------------------------------------
# Kernel: fused N-layer MLP on one (tile_b, latent_dim) batch tile.
# Weights/biases are VMEM-resident across grid steps (constant index_map).
# ---------------------------------------------------------------------------
def _mlp_kernel(n_layers, x_ref, *refs):
    *param_refs, out_ref = refs
    h = x_ref[...]
    for li in range(n_layers):
        w_ref = param_refs[2 * li]
        b_ref = param_refs[2 * li + 1]
        # bf16 operands -> single-pass MXU; f32 accumulation; f32 bias add.
        h = jnp.dot(h.astype(jnp.bfloat16), w_ref[...],
                    preferred_element_type=jnp.float32) + b_ref[...]
        if li < n_layers - 1:          # hidden layers: (Linear+folded BN) -> LeakyReLU
            h = _leaky_relu(h)
    out_ref[...] = h.astype(out_ref.dtype)


# ---------------------------------------------------------------------------
# Wrapper: batch-tiled, pipelined pallas_call. No padding passes over x, no
# post-kernel slicing; output is exactly (batch, n_class).
# ---------------------------------------------------------------------------
@functools.partial(jax.jit, static_argnames=("tile_b",))
def multi_classifier_forward(x, folded, *, tile_b=2048):
    """Forward pass. `folded` is the tuple of (w_bf16, b_f32) pairs from fold_params()."""
    batch, latent_dim = x.shape
    n_layers = len(folded)
    n_class = folded[-1][0].shape[1]          # static (from weight shape)

    # Batch tile: small batches use one full-batch block (block dim == array dim is
    # always legal); large batches use tile_b, halved when needed so the grid has
    # >= 2 steps and the "parallel" axis shards across both v7x TensorCores.
    if batch <= 64:
        tb = batch
    else:
        tb = min(tile_b, _round_up(batch, 8))
        tb = min(tb, _round_up(_cdiv(batch, 2), 8))
    grid = (_cdiv(batch, tb),)                # partial last block masked by Pallas

    in_specs = [pl.BlockSpec((tb, latent_dim), lambda i: (i, 0))]   # x: streamed
    flat_params = []
    for w, b in folded:                       # weights/biases: VMEM-resident
        in_specs.append(pl.BlockSpec(w.shape, lambda i: (0, 0)))
        in_specs.append(pl.BlockSpec(b.shape, lambda i: (0, 0)))
        flat_params += [w, b]

    return pl.pallas_call(
        functools.partial(_mlp_kernel, n_layers),
        out_shape=jax.ShapeDtypeStruct((batch, n_class), jnp.float32),
        grid=grid,
        in_specs=in_specs,
        out_specs=pl.BlockSpec((tb, n_class), lambda i: (i, 0)),
        compiler_params=pltpu.CompilerParams(
            dimension_semantics=("parallel",),    # megacore sharding on v7x
            vmem_limit_bytes=32 << 20,            # actual need is single-digit MiB
        ),
    )(x, *flat_params)


# ---------------------------------------------------------------------------
# Parameter prep: fold eval-mode BatchNorm into the Linear weights/bias and
# cast weights to bf16 (biases stay f32). One-time cost.
# ---------------------------------------------------------------------------
def fold_params(p):
    def fold(w, b, g, be, m, v):
        scale = g * jax.lax.rsqrt(v + BN_EPS)     # (1, out)
        return w * scale, (b - m) * scale + be    # W' = W*s ; b' = (b-m)*s + beta

    w1, b1 = fold(p["w1"], p["b1"], p["g1"], p["be1"], p["m1"], p["v1"])
    w2, b2 = fold(p["w2"], p["b2"], p["g2"], p["be2"], p["m2"], p["v2"])
    w3, b3 = p["w3"], p["b3"]

    return (
        (w1.astype(jnp.bfloat16), b1.astype(jnp.float32)),
        (w2.astype(jnp.bfloat16), b2.astype(jnp.float32)),
        (w3.astype(jnp.bfloat16), b3.astype(jnp.float32)),
    )


# ---------------------------------------------------------------------------
# Synthetic parameters (PyTorch-shaped) and a pure-JAX f32 reference.
# ---------------------------------------------------------------------------
def init_params(key, latent_dim=256, class_dim=(128, 64), n_class=2):
    dims = [latent_dim, *class_dim, n_class]
    keys = jax.random.split(key, 4 * (len(dims) - 1))
    params = {}
    ki = 0

    def linear(in_d, out_d):
        nonlocal ki
        bound = 1.0 / jnp.sqrt(in_d)
        w = jax.random.uniform(keys[ki], (in_d, out_d), jnp.float32, -bound, bound); ki += 1
        b = jax.random.uniform(keys[ki], (1, out_d), jnp.float32, -bound, bound); ki += 1
        return w, b

    def bn(out_d):
        nonlocal ki
        gamma = jnp.ones((1, out_d), jnp.float32)
        beta = jnp.zeros((1, out_d), jnp.float32)
        mean = 0.1 * jax.random.normal(keys[ki], (1, out_d), jnp.float32); ki += 1
        var = jax.random.uniform(keys[ki], (1, out_d), jnp.float32, 0.5, 1.5); ki += 1
        return gamma, beta, mean, var

    params["w1"], params["b1"] = linear(dims[0], dims[1])
    params["g1"], params["be1"], params["m1"], params["v1"] = bn(dims[1])
    params["w2"], params["b2"] = linear(dims[1], dims[2])
    params["g2"], params["be2"], params["m2"], params["v2"] = bn(dims[2])
    params["w3"], params["b3"] = linear(dims[2], dims[3])
    return params


def reference_forward(x, p):
    def bn_eval(h, g, be, m, v):
        return (h - m) * (g * jax.lax.rsqrt(v + BN_EPS)) + be

    h1 = _leaky_relu(bn_eval(x @ p["w1"] + p["b1"], p["g1"], p["be1"], p["m1"], p["v1"]))
    h2 = _leaky_relu(bn_eval(h1 @ p["w2"] + p["b2"], p["g2"], p["be2"], p["m2"], p["v2"]))
    return h2 @ p["w3"] + p["b3"]


if __name__ == "__main__":
    batch, latent_dim, class_dim, n_class = 8, 256, (128, 64), 2

    key = jax.random.PRNGKey(0)
    kx, kp = jax.random.split(key)
    x = jax.random.normal(kx, (batch, latent_dim), jnp.float32)
    params = init_params(kp, latent_dim=latent_dim, class_dim=class_dim, n_class=n_class)
    folded = fold_params(params)

    out = jax.block_until_ready(multi_classifier_forward(x, folded))
    ref = reference_forward(x, params)
    assert out.shape == (batch, n_class)
    # bf16 matmul operands (f32 accumulation) vs f32 reference -> tolerance-level parity.
    assert jnp.allclose(out, ref, rtol=3e-2, atol=3e-2)

    # Ragged batch, single partial block (block dims == full array dims, no masking).
    x2 = jax.random.normal(jax.random.PRNGKey(1), (21, latent_dim), jnp.float32)
    out2 = jax.block_until_ready(multi_classifier_forward(x2, folded))
    assert out2.shape == (21, n_class)
    assert jnp.allclose(out2, reference_forward(x2, params), rtol=3e-2, atol=3e-2)

    # Batch > 64: multi-step grid (>=2 steps for v7x megacore) with masked partial tail.
    x3 = jax.random.normal(jax.random.PRNGKey(2), (100, latent_dim), jnp.float32)
    out3 = jax.block_until_ready(multi_classifier_forward(x3, folded))
    assert out3.shape == (100, n_class)
    assert jnp.allclose(out3, reference_forward(x3, params), rtol=3e-2, atol=3e-2)

    print("KERNEL_OK")
</pallas_src>

<mosaic_0001>
module attributes {stable_mosaic.version = 11 : i64} {
  func.func @_mlp_kernel(%arg0: i32, %arg1: memref<8x256xf32, #tpu.memory_space<vmem>>, %arg2: memref<256x128xbf16, #tpu.memory_space<vmem>>, %arg3: memref<1x128xf32, #tpu.memory_space<vmem>>, %arg4: memref<128x64xbf16, #tpu.memory_space<vmem>>, %arg5: memref<1x64xf32, #tpu.memory_space<vmem>>, %arg6: memref<64x2xbf16, #tpu.memory_space<vmem>>, %arg7: memref<1x2xf32, #tpu.memory_space<vmem>>, %arg8: memref<8x2xf32, #tpu.memory_space<vmem>>) attributes {dimension_semantics = [#tpu.dimension_semantics<parallel>], iteration_bounds = array<i64: 1>, scalar_prefetch = 0 : i64, scratch_operands = 0 : i64, tpu.core_type = #tpu.core_type<tc>, window_params = [{transform_indices = @transform_0, window_bounds = array<i64: 8, 256>}, {pipeline_mode = #tpu.pipeline_mode<synchronous>, transform_indices = @transform_1, window_bounds = array<i64: 256, 128>}, {pipeline_mode = #tpu.pipeline_mode<synchronous>, transform_indices = @transform_2, window_bounds = array<i64: 1, 128>}, {pipeline_mode = #tpu.pipeline_mode<synchronous>, transform_indices = @transform_3, window_bounds = array<i64: 128, 64>}, {pipeline_mode = #tpu.pipeline_mode<synchronous>, transform_indices = @transform_4, window_bounds = array<i64: 1, 64>}, {pipeline_mode = #tpu.pipeline_mode<synchronous>, transform_indices = @transform_5, window_bounds = array<i64: 64, 2>}, {pipeline_mode = #tpu.pipeline_mode<synchronous>, transform_indices = @transform_6, window_bounds = array<i64: 1, 2>}, {transform_indices = @transform_7, window_bounds = array<i64: 8, 2>}]} {
    %c0 = arith.constant 0 : index
    %c0_0 = arith.constant 0 : index
    %0 = vector.load %arg1[%c0, %c0_0] : memref<8x256xf32, #tpu.memory_space<vmem>>, vector<8x256xf32>
    %1 = arith.truncf %0 : vector<8x256xf32> to vector<8x256xbf16>
    %c0_1 = arith.constant 0 : index
    %c0_2 = arith.constant 0 : index
    %2 = vector.load %arg2[%c0_1, %c0_2] : memref<256x128xbf16, #tpu.memory_space<vmem>>, vector<256x128xbf16>
    %cst = arith.constant dense<0.000000e+00> : vector<8x128xf32>
    %3 = tpu.matmul %1, %2, %cst {dimension_numbers = #tpu.dot_dimension_numbers<[1], [0], [0], [1], [0, 0, 1, 1], [], []>} : vector<8x256xbf16>, vector<256x128xbf16>, vector<8x128xf32> -> vector<8x128xf32>
    %c0_3 = arith.constant 0 : index
    %c0_4 = arith.constant 0 : index
    %4 = vector.load %arg3[%c0_3, %c0_4] : memref<1x128xf32, #tpu.memory_space<vmem>>, vector<1x128xf32>
    %5 = vector.broadcast %4 : vector<1x128xf32> to vector<8x128xf32>
    %6 = arith.addf %3, %5 : vector<8x128xf32>
    %cst_5 = arith.constant 0.000000e+00 : f32
    %7 = vector.broadcast %cst_5 : f32 to vector<8x128xf32>
    %8 = arith.cmpf ogt, %6, %7 : vector<8x128xf32>
    %cst_6 = arith.constant 2.000000e-01 : f32
    %9 = vector.broadcast %cst_6 : f32 to vector<8x128xf32>
    %10 = arith.mulf %9, %6 : vector<8x128xf32>
    %11 = arith.select %8, %6, %10 : vector<8x128xi1>, vector<8x128xf32>
    %12 = arith.truncf %11 : vector<8x128xf32> to vector<8x128xbf16>
    %c0_7 = arith.constant 0 : index
    %c0_8 = arith.constant 0 : index
    %13 = vector.load %arg4[%c0_7, %c0_8] : memref<128x64xbf16, #tpu.memory_space<vmem>>, vector<128x64xbf16>
    %cst_9 = arith.constant dense<0.000000e+00> : vector<8x64xf32>
    %14 = tpu.matmul %12, %13, %cst_9 {dimension_numbers = #tpu.dot_dimension_numbers<[1], [0], [0], [1], [0, 0, 1, 1], [], []>} : vector<8x128xbf16>, vector<128x64xbf16>, vector<8x64xf32> -> vector<8x64xf32>
    %c0_10 = arith.constant 0 : index
    %c0_11 = arith.constant 0 : index
    %15 = vector.load %arg5[%c0_10, %c0_11] : memref<1x64xf32, #tpu.memory_space<vmem>>, vector<1x64xf32>
    %16 = vector.broadcast %15 : vector<1x64xf32> to vector<8x64xf32>
    %17 = arith.addf %14, %16 : vector<8x64xf32>
    %cst_12 = arith.constant 0.000000e+00 : f32
    %18 = vector.broadcast %cst_12 : f32 to vector<8x64xf32>
    %19 = arith.cmpf ogt, %17, %18 : vector<8x64xf32>
    %cst_13 = arith.constant 2.000000e-01 : f32
    %20 = vector.broadcast %cst_13 : f32 to vector<8x64xf32>
    %21 = arith.mulf %20, %17 : vector<8x64xf32>
    %22 = arith.select %19, %17, %21 : vector<8x64xi1>, vector<8x64xf32>
    %23 = arith.truncf %22 : vector<8x64xf32> to vector<8x64xbf16>
    %c0_14 = arith.constant 0 : index
    %c0_15 = arith.constant 0 : index
    %24 = vector.load %arg6[%c0_14, %c0_15] : memref<64x2xbf16, #tpu.memory_space<vmem>>, vector<64x2xbf16>
    %cst_16 = arith.constant dense<0.000000e+00> : vector<8x2xf32>
    %25 = tpu.matmul %23, %24, %cst_16 {dimension_numbers = #tpu.dot_dimension_numbers<[1], [0], [0], [1], [0, 0, 1, 1], [], []>} : vector<8x64xbf16>, vector<64x2xbf16>, vector<8x2xf32> -> vector<8x2xf32>
    %c0_17 = arith.constant 0 : index
    %c0_18 = arith.constant 0 : index
    %26 = vector.load %arg7[%c0_17, %c0_18] : memref<1x2xf32, #tpu.memory_space<vmem>>, vector<1x2xf32>
    %27 = vector.broadcast %26 : vector<1x2xf32> to vector<8x2xf32>
    %28 = arith.addf %25, %27 : vector<8x2xf32>
    %c0_19 = arith.constant 0 : index
    %c0_20 = arith.constant 0 : index
    %29 = vector.load %arg8[%c0_19, %c0_20] : memref<8x2xf32, #tpu.memory_space<vmem>>, vector<8x2xf32>
    tpu.vector_store %arg8[%c0_19, %c0_20], %28 {strides = array<i32>} : memref<8x2xf32, #tpu.memory_space<vmem>>, vector<8x2xf32>,
    return
  }
  func.func @transform_0(%arg0: i32) -> (i32, i32) {
    %c0_i32 = arith.constant 0 : i32
    %c0_i32_0 = arith.constant 0 : i32
    return %arg0, %c0_i32 : i32, i32
  }
  func.func @transform_1(%arg0: i32) -> (i32, i32) {
    %c0_i32 = arith.constant 0 : i32
    %c0_i32_0 = arith.constant 0 : i32
    %c0_i32_1 = arith.constant 0 : i32
    return %c0_i32, %c0_i32_0 : i32, i32
  }
  func.func @transform_2(%arg0: i32) -> (i32, i32) {
    %c0_i32 = arith.constant 0 : i32
    %c0_i32_0 = arith.constant 0 : i32
    %c0_i32_1 = arith.constant 0 : i32
    return %c0_i32, %c0_i32_0 : i32, i32
  }
  func.func @transform_3(%arg0: i32) -> (i32, i32) {
    %c0_i32 = arith.constant 0 : i32
    %c0_i32_0 = arith.constant 0 : i32
    %c0_i32_1 = arith.constant 0 : i32
    return %c0_i32, %c0_i32_0 : i32, i32
  }
  func.func @transform_4(%arg0: i32) -> (i32, i32) {
    %c0_i32 = arith.constant 0 : i32
    %c0_i32_0 = arith.constant 0 : i32
    %c0_i32_1 = arith.constant 0 : i32
    return %c0_i32, %c0_i32_0 : i32, i32
  }
  func.func @transform_5(%arg0: i32) -> (i32, i32) {
    %c0_i32 = arith.constant 0 : i32
    %c0_i32_0 = arith.constant 0 : i32
    %c0_i32_1 = arith.constant 0 : i32
    return %c0_i32, %c0_i32_0 : i32, i32
  }
  func.func @transform_6(%arg0: i32) -> (i32, i32) {
    %c0_i32 = arith.constant 0 : i32
    %c0_i32_0 = arith.constant 0 : i32
    %c0_i32_1 = arith.constant 0 : i32
    return %c0_i32, %c0_i32_0 : i32, i32
  }
  func.func @transform_7(%arg0: i32) -> (i32, i32) {
    %c0_i32 = arith.constant 0 : i32
    %c0_i32_0 = arith.constant 0 : i32
    return %arg0, %c0_i32 : i32, i32
  }
}

</mosaic_0001>

<llo_original>
// kernel: multi_classifier_forward.1
$region0: #{multi_classifier_forward.1}
  #allocation0 [shape = 'u32[]', space=smem, size = 0x4, offset = 0x4, fixed_abs, tag = 'smem constant byte address 0x4 - core index']
  #allocation1 [shape = 'u32[144,128]{1,0:T(1,128)}', space=vmem, size = 0x12000, scoped, tag = 'internal scratch']
  %s0 = inlined_call_operand.hbm [shape: f32[8,256], index: 0, kind: input, shape index: {}]
  %s1 = inlined_call_operand.vmem [shape: bf16[256,128], index: 1, kind: input, shape index: {}]
  %s2 = inlined_call_operand.vmem [shape: f32[1,128], index: 2, kind: input, shape index: {}]
  %s3 = inlined_call_operand.vmem [shape: bf16[128,64], index: 3, kind: input, shape index: {}]
  %s4 = inlined_call_operand.vmem [shape: f32[1,64], index: 4, kind: input, shape index: {}]
  %s5 = inlined_call_operand.vmem [shape: bf16[64,2], index: 5, kind: input, shape index: {}]
  %s6 = inlined_call_operand.vmem [shape: f32[1,2], index: 6, kind: input, shape index: {}]
  %s7 = inlined_call_operand.vmem [shape: f32[8,2], index: 7, kind: output, shape index: {}]
  %s8 = sld [smem:[#allocation0]]
  $region42: #{multi_classifier_forward.1} parent=0
    _
  %s10 = ssub.s32 1, %s8
  %s11 = scalar_select 0, %s10, %s8
  $region1: #{multi_classifier_forward.1} parent=0
    #allocation2 [shape = 'u8[8192]{0}', space=vmem, size = 0x2000, scoped, tag = 'input window, operand 0, single buffered']
    #allocation3 [shape = 's32[1]{0}', space=sflag, size = 0x4, scoped, tag = 'scoped memory for multi_classifier_forward.1']
    %12 = vsyncpa [#allocation3], 0
    // Predicated region
    $region2: #{multi_classifier_forward.1} parent=1 // pred_check
      _
    $region3: #{multi_classifier_forward.1} parent=1 // pred_check_branch
      %14 = sbr.rel (0) target = $region5
    $region4: #{multi_classifier_forward.1} parent=1 // pred_region
      %s16 = ssub.s32 256, 256
      %17 = vsyncadd [#allocation3], %s16
      %s19 = sshll.u32 [#allocation2], 4
      %s20 = int_to_ptr.vmem [resolvable:$true] %s19
      %22 = dma.hbm_to_vmem [thread:$0]  %s0, 256, %s20, [#allocation3]
    $region5: #{multi_classifier_forward.1} parent=1 // pred_fallthru
      _
    // Predicated region
    $region6: #{multi_classifier_forward.1} parent=1 // pred_check
      _
    $region7: #{multi_classifier_forward.1} parent=1 // pred_check_branch
      %24 = sbr.rel (0) target = $region9
    $region8: #{multi_classifier_forward.1} parent=1 // pred_region
      _
    $region9: #{multi_classifier_forward.1} parent=1 // pred_fallthru
      _
    // Predicated region
    $region10: #{multi_classifier_forward.1} parent=1 // pred_check
      _
    $region11: #{multi_classifier_forward.1} parent=1 // pred_check_branch
      %26 = sbr.rel (0) target = $region13
    $region12: #{multi_classifier_forward.1} parent=1 // pred_region
      _
    $region13: #{multi_classifier_forward.1} parent=1 // pred_fallthru
      _
    // Predicated region
    $region14: #{multi_classifier_forward.1} parent=1 // pred_check
      _
    $region15: #{multi_classifier_forward.1} parent=1 // pred_check_branch
      %28 = sbr.rel (0) target = $region17
    $region16: #{multi_classifier_forward.1} parent=1 // pred_region
      _
    $region17: #{multi_classifier_forward.1} parent=1 // pred_fallthru
      _
    // Predicated region
    $region18: #{multi_classifier_forward.1} parent=1 // pred_check
      _
    $region19: #{multi_classifier_forward.1} parent=1 // pred_check_branch
      %30 = sbr.rel (0) target = $region21
    $region20: #{multi_classifier_forward.1} parent=1 // pred_region
      _
    $region21: #{multi_classifier_forward.1} parent=1 // pred_fallthru
      _
    // Predicated region
    $region22: #{multi_classifier_forward.1} parent=1 // pred_check
      _
    $region23: #{multi_classifier_forward.1} parent=1 // pred_check_branch
      %32 = sbr.rel (0) target = $region25
    $region24: #{multi_classifier_forward.1} parent=1 // pred_region
      _
    $region25: #{multi_classifier_forward.1} parent=1 // pred_fallthru
      _
    // Predicated region
    $region26: #{multi_classifier_forward.1} parent=1 // pred_check
      _
    $region27: #{multi_classifier_forward.1} parent=1 // pred_check_branch
      %34 = sbr.rel (0) target = $region29
    $region28: #{multi_classifier_forward.1} parent=1 // pred_region
      _
    $region29: #{multi_classifier_forward.1} parent=1 // pred_fallthru
      _
    // Predicated region
    $region30: #{multi_classifier_forward.1} parent=1 // pred_check
      _
    $region31: #{multi_classifier_forward.1} parent=1 // pred_check_branch
      %36 = sbr.rel (0) target = $region33
    $region32: #{multi_classifier_forward.1} parent=1 // pred_region
      %37 = dma.done [#allocation3], 256
    $region33: #{multi_classifier_forward.1} parent=1 // pred_fallthru
      _
    %v39 = vld [vmem:[#allocation2] sm:$0xff]
    %v40 = vld [vmem:[#allocation2 + $0x8] sm:$0xff]
    %v41 = vpack.c.bf16 %v39, %v39
    %v42 = vpack.c.bf16 %v40, %v40
    %v43 = vld [vmem:[%s1] sm:$0xf]
    %v44 = vld [vmem:[%s1 + $0x4] sm:$0xf]
    %v45 = vld [vmem:[%s1 + $0x8] sm:$0xf]
    %v46 = vld [vmem:[%s1 + $0xc] sm:$0xf]
    %v47 = vld [vmem:[%s1 + $0x10] sm:$0xf]
    %v48 = vld [vmem:[%s1 + $0x14] sm:$0xf]
    %v49 = vld [vmem:[%s1 + $0x18] sm:$0xf]
    %v50 = vld [vmem:[%s1 + $0x1c] sm:$0xf]
    %v51 = vld [vmem:[%s1 + $0x20] sm:$0xf]
    %v52 = vld [vmem:[%s1 + $0x24] sm:$0xf]
    %v53 = vld [vmem:[%s1 + $0x28] sm:$0xf]
    %v54 = vld [vmem:[%s1 + $0x2c] sm:$0xf]
    %v55 = vld [vmem:[%s1 + $0x30] sm:$0xf]
    %v56 = vld [vmem:[%s1 + $0x34] sm:$0xf]
    %v57 = vld [vmem:[%s1 + $0x38] sm:$0xf]
    %v58 = vld [vmem:[%s1 + $0x3c] sm:$0xf]
    %v59 = vld [vmem:[%s1 + $0x40] sm:$0xf]
    %v60 = vld [vmem:[%s1 + $0x44] sm:$0xf]
    %v61 = vld [vmem:[%s1 + $0x48] sm:$0xf]
    %v62 = vld [vmem:[%s1 + $0x4c] sm:$0xf]
    %v63 = vld [vmem:[%s1 + $0x50] sm:$0xf]
    %v64 = vld [vmem:[%s1 + $0x54] sm:$0xf]
    %v65 = vld [vmem:[%s1 + $0x58] sm:$0xf]
    %v66 = vld [vmem:[%s1 + $0x5c] sm:$0xf]
    %v67 = vld [vmem:[%s1 + $0x60] sm:$0xf]
    %v68 = vld [vmem:[%s1 + $0x64] sm:$0xf]
    %v69 = vld [vmem:[%s1 + $0x68] sm:$0xf]
    %v70 = vld [vmem:[%s1 + $0x6c] sm:$0xf]
    %v71 = vld [vmem:[%s1 + $0x70] sm:$0xf]
    %v72 = vld [vmem:[%s1 + $0x74] sm:$0xf]
    %v73 = vld [vmem:[%s1 + $0x78] sm:$0xf]
    %v74 = vld [vmem:[%s1 + $0x7c] sm:$0xf]
    %v75 = vld [vmem:[%s2] sm:$0x1]
    %v77 = vlaneseq
    %v78 = vshrl.u32 %v77, 7
    %v79 = vsub.s32 0, %v78
    %v80 = vrot.slane %v75, %v79
    %v114 = vunpack.c.l.b16 %v43
    %v115 = vunpack.c.l.b16 %v44
    %v116 = vunpack.c.l.b16 %v45
    %v117 = vunpack.c.l.b16 %v46
    %v118 = vunpack.c.l.b16 %v47
    %v119 = vunpack.c.l.b16 %v48
    %v120 = vunpack.c.l.b16 %v49
    %v121 = vunpack.c.l.b16 %v50
    %v122 = vunpack.c.l.b16 %v51
    %v123 = vunpack.c.l.b16 %v52
    %v124 = vunpack.c.l.b16 %v53
    %v125 = vunpack.c.l.b16 %v54
    %v126 = vunpack.c.l.b16 %v55
    %v127 = vunpack.c.l.b16 %v56
    %v128 = vunpack.c.l.b16 %v57
    %v129 = vunpack.c.l.b16 %v58
    %v130 = vunpack.c.l.b16 %v59
    %v131 = vunpack.c.l.b16 %v60
    %v132 = vunpack.c.l.b16 %v61
    %v133 = vunpack.c.l.b16 %v62
    %v134 = vunpack.c.l.b16 %v63
    %v135 = vunpack.c.l.b16 %v64
    %v136 = vunpack.c.l.b16 %v65
    %v137 = vunpack.c.l.b16 %v66
    %v138 = vunpack.c.l.b16 %v67
    %v139 = vunpack.c.l.b16 %v68
    %v140 = vunpack.c.l.b16 %v69
    %v141 = vunpack.c.l.b16 %v70
    %v142 = vunpack.c.l.b16 %v71
    %v143 = vunpack.c.l.b16 %v72
    %v144 = vunpack.c.l.b16 %v73
    %v145 = vunpack.c.l.b16 %v74
    %v146 = vpack.c.b16 %v115, %v114
    %v147 = vpack.c.b16 %v117, %v116
    %v148 = vpack.c.b16 %v119, %v118
    %v149 = vpack.c.b16 %v121, %v120
    %v150 = vpack.c.b16 %v123, %v122
    %v151 = vpack.c.b16 %v125, %v124
    %v152 = vpack.c.b16 %v127, %v126
    %v153 = vpack.c.b16 %v129, %v128
    %v154 = vpack.c.b16 %v131, %v130
    %v155 = vpack.c.b16 %v133, %v132
    %v156 = vpack.c.b16 %v135, %v134
    %v157 = vpack.c.b16 %v137, %v136
    %v158 = vpack.c.b16 %v139, %v138
    %v159 = vpack.c.b16 %v141, %v140
    %v160 = vpack.c.b16 %v143, %v142
    %v161 = vpack.c.b16 %v145, %v144
    %178 = vmatprep.subr.bf16.mxu0 0
    %179 = vmatpush1.bf16.msra.mxu0 %v153
    %180 = vmatprep.subr.bf16.mxu0 0
    %181 = vmatpush1.bf16.msra.mxu0 %v152
    %182 = vmatprep.subr.bf16.mxu0 0
    %183 = vmatpush1.bf16.msra.mxu0 %v151
    %184 = vmatprep.subr.bf16.mxu0 0
    %185 = vmatpush1.bf16.msra.mxu0 %v150
    %186 = vmatprep.subr.bf16.mxu0 0
    %187 = vmatpush1.bf16.msra.mxu0 %v149
    %188 = vmatprep.subr.bf16.mxu0 0
    %189 = vmatpush1.bf16.msra.mxu0 %v148
    %190 = vmatprep.subr.bf16.mxu0 0
    %191 = vmatpush1.bf16.msra.mxu0 %v147
    %192 = vmatprep.subr.bf16.mxu0 0
    %193 = vmatpush1.bf16.msra.mxu0 %v146
    %194 = vmatprep.subr.bf16.mxu0 0
    %195 = vmatpush2.bf16.msra.mxu0 %v161
    %196 = vmatprep.subr.bf16.mxu0 0
    %197 = vmatpush2.bf16.msra.mxu0 %v160
    %198 = vmatprep.subr.bf16.mxu0 0
    %199 = vmatpush2.bf16.msra.mxu0 %v159
    %200 = vmatprep.subr.bf16.mxu0 0
    %201 = vmatpush2.bf16.msra.mxu0 %v158
    %202 = vmatprep.subr.bf16.mxu0 0
    %203 = vmatpush2.bf16.msra.mxu0 %v157
    %204 = vmatprep.subr.bf16.mxu0 0
    %205 = vmatpush2.bf16.msra.mxu0 %v156
    %206 = vmatprep.subr.bf16.mxu0 0
    %207 = vmatpush2.bf16.msra.mxu0 %v155
    %208 = vmatprep.subr.bf16.mxu0 0
    %209 = vmatpush2.bf16.msra.mxu0 %v154
    %210 = vmatprep.mubr.bf16.mxu0 %v42
    %211 = vmatmul.mubr.bf16.gmra.mxu0 %v41
    %v212 = vpop.f32.mrf.mxu0
    %v213 = vadd.f32 %v80, %v212
    %v214 = vpop.f32.mrf.mxu0
    %v215 = vpop.f32.mrf.mxu0
    %v216 = vpop.f32.mrf.mxu0
    %217 = vdwg.mxu0
    %vm218 = vcmp.gt.f32.partialorder %v213, 0.0
    %v219 = vmul.f32 %v213, 0.2
    %v220 = vsel %vm218, %v213, %v219
    %v221 = vpack.c.bf16 %v220, %v220
    %v222 = vld [vmem:[%s3] sm:$0xf]
    %v223 = vld [vmem:[%s3 + $0x4] sm:$0xf]
    %v224 = vld [vmem:[%s3 + $0x8] sm:$0xf]
    %v225 = vld [vmem:[%s3 + $0xc] sm:$0xf]
    %v226 = vld [vmem:[%s3 + $0x10] sm:$0xf]
    %v227 = vld [vmem:[%s3 + $0x14] sm:$0xf]
    %v228 = vld [vmem:[%s3 + $0x18] sm:$0xf]
    %v229 = vld [vmem:[%s3 + $0x1c] sm:$0xf]
    %v230 = vld [vmem:[%s3 + $0x20] sm:$0xf]
    %v231 = vld [vmem:[%s3 + $0x24] sm:$0xf]
    %v232 = vld [vmem:[%s3 + $0x28] sm:$0xf]
    %v233 = vld [vmem:[%s3 + $0x2c] sm:$0xf]
    %v234 = vld [vmem:[%s3 + $0x30] sm:$0xf]
    %v235 = vld [vmem:[%s3 + $0x34] sm:$0xf]
    %v236 = vld [vmem:[%s3 + $0x38] sm:$0xf]
    %v237 = vld [vmem:[%s3 + $0x3c] sm:$0xf]
    %v238 = vld [vmem:[%s4] sm:$0x1]
    %v240 = vlaneseq
    %v241 = vshrl.u32 %v240, 7
    %v242 = vsub.s32 0, %v241
    %v243 = vrot.slane %v238, %v242
    %v261 = vunpack.c.l.b16 %v222
    %v262 = vunpack.c.l.b16 %v223
    %v263 = vunpack.c.l.b16 %v224
    %v264 = vunpack.c.l.b16 %v225
    %v265 = vunpack.c.l.b16 %v226
    %v266 = vunpack.c.l.b16 %v227
    %v267 = vunpack.c.l.b16 %v228
    %v268 = vunpack.c.l.b16 %v229
    %v269 = vunpack.c.l.b16 %v230
    %v270 = vunpack.c.l.b16 %v231
    %v271 = vunpack.c.l.b16 %v232
    %v272 = vunpack.c.l.b16 %v233
    %v273 = vunpack.c.l.b16 %v234
    %v274 = vunpack.c.l.b16 %v235
    %v275 = vunpack.c.l.b16 %v236
    %v276 = vunpack.c.l.b16 %v237
    %v277 = vpack.c.b16 %v262, %v261
    %v278 = vpack.c.b16 %v264, %v263
    %v279 = vpack.c.b16 %v266, %v265
    %v280 = vpack.c.b16 %v268, %v267
    %v281 = vpack.c.b16 %v270, %v269
    %v282 = vpack.c.b16 %v272, %v271
    %v283 = vpack.c.b16 %v274, %v273
    %v284 = vpack.c.b16 %v276, %v275
    %293 = vmatprep.subr.bf16.mxu0 0
    %294 = vmatpush1.bf16.msra.mxu0 %v284
    %295 = vmatprep.subr.bf16.mxu0 0
    %296 = vmatpush1.bf16.msra.mxu0 %v283
    %297 = vmatprep.subr.bf16.mxu0 0
    %298 = vmatpush1.bf16.msra.mxu0 %v282
    %299 = vmatprep.subr.bf16.mxu0 0
    %300 = vmatpush1.bf16.msra.mxu0 %v281
    %301 = vmatprep.subr.bf16.mxu0 0
    %302 = vmatpush1.bf16.msra.mxu0 %v280
    %303 = vmatprep.subr.bf16.mxu0 0
    %304 = vmatpush1.bf16.msra.mxu0 %v279
    %305 = vmatprep.subr.bf16.mxu0 0
    %306 = vmatpush1.bf16.msra.mxu0 %v278
    %307 = vmatprep.subr.bf16.mxu0 0
    %308 = vmatpush1.bf16.msra.mxu0 %v277
    %309 = vmatprep.subr.bf16.mxu0 0
    %310 = vmatpush2.bf16.msra.mxu0 0
    %311 = vmatprep.subr.bf16.mxu0 0
    %312 = vmatpush2.bf16.msra.mxu0 0
    %313 = vmatprep.subr.bf16.mxu0 0
    %314 = vmatpush2.bf16.msra.mxu0 0
    %315 = vmatprep.subr.bf16.mxu0 0
    %316 = vmatpush2.bf16.msra.mxu0 0
    %317 = vmatprep.subr.bf16.mxu0 0
    %318 = vmatpush2.bf16.msra.mxu0 0
    %319 = vmatprep.subr.bf16.mxu0 0
    %320 = vmatpush2.bf16.msra.mxu0 0
    %321 = vmatprep.subr.bf16.mxu0 0
    %322 = vmatpush2.bf16.msra.mxu0 0
    %323 = vmatprep.subr.bf16.mxu0 0
    %324 = vmatpush2.bf16.msra.mxu0 0
    %325 = vmatprep.mubr.bf16.mxu0 0
    %326 = vmatmul.mubr.bf16.gmra.mxu0 %v221
    %v327 = vpop.f32.mrf.mxu0
    %v328 = vadd.f32 %v243, %v327
    %v329 = vpop.f32.mrf.mxu0
    %v330 = vpop.f32.mrf.mxu0
    %v331 = vpop.f32.mrf.mxu0
    %332 = vdwg.mxu0
    %vm333 = vcmp.gt.f32.partialorder %v328, 0.0
    %v334 = vmul.f32 %v328, 0.2
    %v335 = vsel %vm333, %v328, %v334
    %v336 = vpack.c.bf16 %v335, %v335
    %v337 = vld [vmem:[%s5] sm:$0xf]
    %v338 = vld [vmem:[%s5 + $0x4] sm:$0xf]
    %v339 = vld [vmem:[%s5 + $0x8] sm:$0xf]
    %v340 = vld [vmem:[%s5 + $0xc] sm:$0xf]
    %v341 = vld [vmem:[%s5 + $0x10] sm:$0xf]
    %v342 = vld [vmem:[%s5 + $0x14] sm:$0xf]
    %v343 = vld [vmem:[%s5 + $0x18] sm:$0xf]
    %v344 = vld [vmem:[%s5 + $0x1c] sm:$0xf]
    %v345 = vld [vmem:[%s6] sm:$0x1]
    %v347 = vlaneseq
    %v348 = vshrl.u32 %v347, 7
    %v349 = vsub.s32 0, %v348
    %v350 = vrot.slane %v345, %v349
    %v360 = vunpack.c.l.b16 %v337
    %v361 = vunpack.c.l.b16 %v338
    %v362 = vunpack.c.l.b16 %v339
    %v363 = vunpack.c.l.b16 %v340
    %v364 = vunpack.c.l.b16 %v341
    %v365 = vunpack.c.l.b16 %v342
    %v366 = vunpack.c.l.b16 %v343
    %v367 = vunpack.c.l.b16 %v344
    %v368 = vpack.c.b16 %v361, %v360
    %v369 = vpack.c.b16 %v363, %v362
    %v370 = vpack.c.b16 %v365, %v364
    %v371 = vpack.c.b16 %v367, %v366
    %vm376 = vcmask 523264
    %v378 = vsel %vm376, %v336, 0
    %380 = vmatprep.subr.bf16.mxu0 0
    %381 = vmatpush1.bf16.msra.mxu0 0
    %382 = vmatprep.subr.bf16.mxu0 0
    %383 = vmatpush1.bf16.msra.mxu0 0
    %384 = vmatprep.subr.bf16.mxu0 0
    %385 = vmatpush1.bf16.msra.mxu0 0
    %386 = vmatprep.subr.bf16.mxu0 0
    %387 = vmatpush1.bf16.msra.mxu0 0
    %388 = vmatprep.subr.bf16.mxu0 0
    %389 = vmatpush1.bf16.msra.mxu0 %v371
    %390 = vmatprep.subr.bf16.mxu0 0
    %391 = vmatpush1.bf16.msra.mxu0 %v370
    %392 = vmatprep.subr.bf16.mxu0 0
    %393 = vmatpush1.bf16.msra.mxu0 %v369
    %394 = vmatprep.subr.bf16.mxu0 0
    %395 = vmatpush1.bf16.msra.mxu0 %v368
    %396 = vmatprep.subr.bf16.mxu0 0
    %397 = vmatpush2.bf16.msra.mxu0 0
    %398 = vmatprep.subr.bf16.mxu0 0
    %399 = vmatpush2.bf16.msra.mxu0 0
    %400 = vmatprep.subr.bf16.mxu0 0
    %401 = vmatpush2.bf16.msra.mxu0 0
    %402 = vmatprep.subr.bf16.mxu0 0
    %403 = vmatpush2.bf16.msra.mxu0 0
    %404 = vmatprep.subr.bf16.mxu0 0
    %405 = vmatpush2.bf16.msra.mxu0 0
    %406 = vmatprep.subr.bf16.mxu0 0
    %407 = vmatpush2.bf16.msra.mxu0 0
    %408 = vmatprep.subr.bf16.mxu0 0
    %409 = vmatpush2.bf16.msra.mxu0 0
    %410 = vmatprep.subr.bf16.mxu0 0
    %411 = vmatpush2.bf16.msra.mxu0 0
    %412 = vmatprep.mubr.bf16.mxu0 0
    %413 = vmatmul.mubr.bf16.gmra.mxu0 %v378
    %v414 = vpop.f32.mrf.mxu0
    %v415 = vadd.f32 %v350, %v414
    %v416 = vpop.f32.mrf.mxu0
    %v417 = vpop.f32.mrf.mxu0
    %v418 = vpop.f32.mrf.mxu0
    %419 = vdwg.mxu0
    %vm420 = vcmask 15360
    %421 = vst.msk [vmem:[%s7] sm:$0xff] %vm420, %v415
    // Predicated region
    $region34: #{multi_classifier_forward.1} parent=1 // pred_check
      _
    $region35: #{multi_classifier_forward.1} parent=1 // pred_check_branch
      %423 = sbr.rel (0) target = $region37
    $region36: #{multi_classifier_forward.1} parent=1 // pred_region
      _
    $region37: #{multi_classifier_forward.1} parent=1 // pred_fallthru
      _
    // Predicated region
    $region38: #{multi_classifier_forward.1} parent=1 // pred_check
      _
    $region39: #{multi_classifier_forward.1} parent=1 // pred_check_branch
      %425 = sbr.rel (0) target = $region41
    $region40: #{multi_classifier_forward.1} parent=1 // pred_region
      _
    $region41: #{multi_classifier_forward.1} parent=1 // pred_fallthru
      _
    %426 = vsyncpa [#allocation3], 1

</llo_original>
